<compile_context>
chip_gen: v5e
topology: v5e:2x2
jax: 0.10.0
libtpu: 0.0.40
codegen_flags: <defaults>
</compile_context>

<pallas_src>
import jax
import jax.numpy as jnp
from jax.experimental import pallas as pl
from jax.experimental.pallas import tpu as pltpu

BN_EPS = 1e-5

# Row-tile size (rows of the 128-lane packed activation) for both passes.  Sweep 1024-2048 in
# production; keep v7x tiles >= v6e tiles (VMEM is not the constraint; HBM BW is higher).
# At tile=1024 the double-buffered working set is ~2.5 MiB -- far below the default scoped
# VMEM on v5e/v6e/v7x, so no vmem_limit_bytes override is needed.
MAX_TILE_ROWS = 1024
# Number of partial BN-stats accumulators == extent of the leading "parallel" grid axis of
# pass 1.  2 lets v7x's two TensorCores split the stats reduction; harmless on v5e/v6e (1 TC).
STATS_PARTIALS = 2


def _round_up(x, m):
    return (x + m - 1) // m * m


# ---------------------------------------------------------------------------------- kernels


def convt_relu_stats_kernel(xa_ref, w_ref, y_ref, sum_ref, sumsq_ref):
    """Pass 1 (fused): phase-decomposed transposed conv (+bias via the ones column of xa/w)
    -> ReLU -> write y once (bf16/f32) -> accumulate per-lane BN sum / sum-of-squares in f32.

    The contraction depth (G*taps*Cin + 1 = 145 here) is deliberately shallow -- the MXU is
    nowhere near saturated and that is fine: the pipeline is HBM-bound, so fusion and the
    lane-dense 128-wide tiles are the levers, not MXU shape.
    """
    @pl.when(pl.program_id(1) == 0)          # first step of this partial's row range
    def _():
        sum_ref[...] = jnp.zeros_like(sum_ref)
        sumsq_ref[...] = jnp.zeros_like(sumsq_ref)

    y = jnp.maximum(
        jnp.dot(xa_ref[...], w_ref[...], preferred_element_type=jnp.float32), 0.0)
    # All-zero padded rows (including their zeroed bias column) give y == 0 exactly, so they
    # contribute nothing to either accumulator -- no masking / NEG_PAD trick needed.
    sum_ref[0:1, :] += jnp.sum(y, axis=0, keepdims=True)
    sumsq_ref[0:1, :] += jnp.sum(y * y, axis=0, keepdims=True)
    y_ref[...] = y.astype(y_ref.dtype)


def bn_apply_kernel(y_ref, params_ref, o_ref):
    """Pass 2: out = y * scale + shift.  scale/shift are packed as rows 0/1 of one operand."""
    y = y_ref[...].astype(jnp.float32)
    scale = params_ref[0:1, :]
    shift = params_ref[1:2, :]
    o_ref[...] = y * scale + shift


# ---------------------------------------------------------------------------------- forward


def trans_conv_forward(x_nchw, weight, bias, gamma, beta, stride, padding,
                       y_dtype=jnp.bfloat16):
    """TransConv.forward.  x: [N, Cin, H, W]; weight: [Cin, Cout, kH, kW] (PyTorch layout).
    y_dtype: dtype of the HBM-resident post-ReLU intermediate (bf16 halves its traffic)."""
    N, Cin, H, W = x_nchw.shape
    Cin_w, Cout, kH, kW = weight.shape
    assert Cin == Cin_w and kH == kW
    k, s, p = kH, stride, padding
    Ho = (H - 1) * s - 2 * p + k
    Wo = (W - 1) * s - 2 * p + k
    assert k % s == 0, "phase decomposition assumes stride divides kernel_size"
    assert Ho == s * H and Wo == s * W, (
        "this phase decomposition assumes the clean-upsampling config k == s + 2*p "
        "(e.g. 4/2/1)")
    # TODO(synk): for general (k, s, p) fall back to per-phase padding/cropping (or the
    # phase-grouped col2im form); only the PatchGAN-style 2x upsampling config is wired here.

    f32 = jnp.float32

    # ---- phase/offset geometry --------------------------------------------------------
    # out[ho = s*q + ph] = sum over x[hi = q + off] * W[kh] with kh = ph + p - s*off.
    off_hi = (s - 1 + p) // s
    off_lo = p // s - k // s + 1
    assert off_lo <= 0 <= off_hi
    offs = list(range(off_lo, off_hi + 1))
    n_off = len(offs)

    # ---- packing geometry ---------------------------------------------------------------
    L_pix = s * s * Cout                     # lanes per pixel, ordered (ph, pw, co), co fastest
    G = max(1, 128 // L_pix)                 # pixels packed per row -> 128 lanes when L_pix|128
    L = G * L_pix
    K1 = n_off * n_off * Cin                 # contraction per pixel (36 here)
    K = G * K1 + 1                           # block-diagonal contraction + 1 bias column (145)
    M = N * H * W                            # input pixels == output pixels / s^2
    rows = -(-M // G)
    n_pad_px = rows * G - M

    # ---- the only pre-kernel pass over x: gather the 9 shifted taps (im2col, 36 f32/px) ---
    # TODO(synk): this tap gather could also be stored bf16 or done in-kernel with halo DMAs
    # from x in pl.ANY memory space; kept f32 wrapper-side for tight numeric parity.
    x_nhwc = jnp.transpose(x_nchw, (0, 2, 3, 1)).astype(f32)
    pad_lo, pad_hi = -off_lo, off_hi
    x_padded = jnp.pad(x_nhwc, ((0, 0), (pad_lo, pad_hi), (pad_lo, pad_hi), (0, 0)))
    taps = []
    for oh_i in range(n_off):
        for ow_i in range(n_off):
            taps.append(x_padded[:, oh_i:oh_i + H, ow_i:ow_i + W, :])
    x_taps = jnp.concatenate(taps, axis=-1).reshape(M, K1)
    if n_pad_px:
        x_taps = jnp.pad(x_taps, ((0, n_pad_px), (0, 0)))
    x_pack = x_taps.reshape(rows, G * K1)                       # free reshape: G px per row
    xa = jnp.concatenate([x_pack, jnp.ones((rows, 1), f32)], axis=-1)   # +1 bias column

    # ---- tiling ---------------------------------------------------------------------------
    tile = min(MAX_TILE_ROWS, _round_up(-(-rows // STATS_PARTIALS), 16))
    rows_pad = _round_up(rows, STATS_PARTIALS * tile)
    if rows_pad != rows:
        xa = jnp.pad(xa, ((0, rows_pad - rows), (0, 0)))        # all-zero rows -> y == 0
    n_inner = rows_pad // (STATS_PARTIALS * tile)

    # ---- block-diagonal phase weight (+ bias row): [K, L] ----------------------------------
    w_all = jnp.zeros((n_off, n_off, Cin, s, s, Cout), f32)
    for ph in range(s):
        for pw in range(s):
            for oh_i, off_h in enumerate(offs):
                kh = ph + p - s * off_h
                if not (0 <= kh < k):
                    continue
                for ow_i, off_w in enumerate(offs):
                    kw = pw + p - s * off_w
                    if not (0 <= kw < k):
                        continue
                    w_all = w_all.at[oh_i, ow_i, :, ph, pw, :].set(
                        weight[:, :, kh, kw].astype(f32))
    w_all = w_all.reshape(K1, L_pix)
    w_bd = jnp.zeros((K, L), f32)
    for g in range(G):
        w_bd = w_bd.at[g * K1:(g + 1) * K1, g * L_pix:(g + 1) * L_pix].set(w_all)
    w_bd = w_bd.at[K - 1, :].set(jnp.tile(bias.astype(f32), G * s * s))   # bias row

    # ---- pass 1: fused conv + bias + ReLU + BN-stats; y written to HBM exactly once --------
    y_pack, ssum, ssq = pl.pallas_call(
        convt_relu_stats_kernel,
        out_shape=(jax.ShapeDtypeStruct((rows_pad, L), y_dtype),
                   jax.ShapeDtypeStruct((STATS_PARTIALS * 8, L), f32),
                   jax.ShapeDtypeStruct((STATS_PARTIALS * 8, L), f32)),
        grid=(STATS_PARTIALS, n_inner),
        in_specs=[
            pl.BlockSpec((tile, K), lambda c, i: (c * n_inner + i, 0)),
            pl.BlockSpec((K, L), lambda c, i: (0, 0)),
        ],
        out_specs=(
            pl.BlockSpec((tile, L), lambda c, i: (c * n_inner + i, 0)),
            pl.BlockSpec((8, L), lambda c, i: (c, 0)),     # partial accumulator per c
            pl.BlockSpec((8, L), lambda c, i: (c, 0)),
        ),
        compiler_params=pltpu.CompilerParams(
            dimension_semantics=("parallel", "arbitrary")),
    )(xa, w_bd)

    # ---- fold partial per-lane stats into per-channel statistics (tiny, plain JAX) ---------
    cnt = jnp.float32(N * Ho * Wo)
    ch_sum = ssum.reshape(-1, G * s * s, Cout).sum(axis=(0, 1))
    ch_sumsq = ssq.reshape(-1, G * s * s, Cout).sum(axis=(0, 1))
    if n_pad_px:
        # Padded pixel slots inside the last real packed row saw x == 0 but still received the
        # bias column -> each contributed relu(bias) per phase lane; remove that exactly.
        pad_y = jnp.maximum(bias.astype(f32), 0.0)
        ch_sum = ch_sum - (n_pad_px * s * s) * pad_y
        ch_sumsq = ch_sumsq - (n_pad_px * s * s) * pad_y * pad_y
    mean = ch_sum / cnt
    # NOTE: single-pass E[x^2]-E[x]^2 in f32 is adequate at these magnitudes/counts; switch to
    # a centered/Welford accumulation if counts grow enough for cancellation to matter.
    var = jnp.maximum(ch_sumsq / cnt - mean * mean, 0.0)   # biased var (training-mode norm)
    scale = gamma.astype(f32) * jax.lax.rsqrt(var + BN_EPS)
    shift = beta.astype(f32) - mean * scale
    params = jnp.stack([jnp.tile(scale, G * s * s), jnp.tile(shift, G * s * s)])   # [2, L]

    # ---- pass 2: y read once, affine applied, lane-dense 128-wide stores --------------------
    out_pack = pl.pallas_call(
        bn_apply_kernel,
        out_shape=jax.ShapeDtypeStruct((rows_pad, L), f32),
        grid=(rows_pad // tile,),
        in_specs=[
            pl.BlockSpec((tile, L), lambda i: (i, 0)),
            pl.BlockSpec((2, L), lambda i: (0, 0)),
        ],
        out_specs=pl.BlockSpec((tile, L), lambda i: (i, 0)),
        compiler_params=pltpu.CompilerParams(dimension_semantics=("parallel",)),
    )(y_pack, params)

    # ---- free unpack + ONE layout pass (phase interleave + NHWC->NCHW done together) --------
    out = out_pack[:rows].reshape(rows * G, s, s, Cout)[:M].reshape(N, H, W, s, s, Cout)
    # This single transpose is one extra read+write of the output; drop it if the consumer can
    # take the packed / NHWC layout directly.
    out = out.transpose(0, 5, 1, 3, 2, 4).reshape(N, Cout, Ho, Wo)
    # TODO(synk): BatchNorm2d running_mean/running_var buffer updates (momentum, unbiased
    # variance) are not produced; only the forward output path of the module is implemented.
    return out


# ---------------------------------------------------------------------------------- reference


def reference(x, weight, bias, gamma, beta, stride, padding):
    # pure-JAX reference of the same PyTorch semantics (for verification)
    k = weight.shape[2]
    w_conv = jnp.flip(weight, axis=(2, 3)).transpose(1, 0, 2, 3)    # OIHW
    pe = k - 1 - padding
    y = jax.lax.conv_general_dilated(
        x, w_conv, window_strides=(1, 1),
        padding=[(pe, pe), (pe, pe)], lhs_dilation=(stride, stride),
        dimension_numbers=("NCHW", "OIHW", "NCHW"))
    y = y + bias[None, :, None, None]
    y = jnp.maximum(y, 0.0)
    mean = y.mean(axis=(0, 2, 3), keepdims=True)
    var = ((y - mean) ** 2).mean(axis=(0, 2, 3), keepdims=True)
    y = (y - mean) * jax.lax.rsqrt(var + BN_EPS)
    return y * gamma[None, :, None, None] + beta[None, :, None, None]


if __name__ == "__main__":
    # TransConv(in_planes=4, out_planes=8, kernel_size=4, stride=2, padding=1)
    in_planes, out_planes, kernel_size, stride, padding = 4, 8, 4, 2, 1
    N, H, W = 2, 16, 16

    key = jax.random.PRNGKey(0)
    kx, kw, kb, kg, kbe = jax.random.split(key, 5)
    x = jax.random.normal(kx, (N, in_planes, H, W), dtype=jnp.float32)
    # ConvTranspose2d weight layout: (in_planes, out_planes, kH, kW)
    weight = 0.1 * jax.random.normal(kw, (in_planes, out_planes, kernel_size, kernel_size),
                                     dtype=jnp.float32)
    bias = 0.1 * jax.random.normal(kb, (out_planes,), dtype=jnp.float32)
    gamma = 1.0 + 0.1 * jax.random.normal(kg, (out_planes,), dtype=jnp.float32)
    beta = 0.1 * jax.random.normal(kbe, (out_planes,), dtype=jnp.float32)

    fwd = jax.jit(trans_conv_forward, static_argnums=(5, 6, 7))
    y_ref = reference(x, weight, bias, gamma, beta, stride, padding)
    Ho = (H - 1) * stride - 2 * padding + kernel_size
    Wo = (W - 1) * stride - 2 * padding + kernel_size

    # f32 intermediate: tight parity check against the pure-JAX reference.
    y32 = jax.block_until_ready(fwd(x, weight, bias, gamma, beta, stride, padding, jnp.float32))
    assert y32.shape == (N, out_planes, Ho, Wo)
    assert jnp.allclose(y32, y_ref, rtol=2e-4, atol=2e-4), "f32 path mismatch vs reference"

    # bf16 HBM intermediate (the recommended config on v5e/v6e/v7x): looser tolerance because
    # the post-ReLU activation is rounded to bf16 before the affine normalization is applied.
    y16 = jax.block_until_ready(fwd(x, weight, bias, gamma, beta, stride, padding, jnp.bfloat16))
    assert y16.shape == (N, out_planes, Ho, Wo)
    assert jnp.allclose(y16, y_ref, rtol=1e-2, atol=5e-2), "bf16 path mismatch vs reference"

    print("KERNEL_OK")
</pallas_src>

<mosaic_0001>
module attributes {stable_mosaic.version = 11 : i64} {
  func.func @convt_relu_stats_kernel(%arg0: i32, %arg1: i32, %arg2: memref<64x145xf32, #tpu.memory_space<vmem>>, %arg3: memref<145x128xf32, #tpu.memory_space<vmem>>, %arg4: memref<64x128xf32, #tpu.memory_space<vmem>>, %arg5: memref<8x128xf32, #tpu.memory_space<vmem>>, %arg6: memref<8x128xf32, #tpu.memory_space<vmem>>) attributes {dimension_semantics = [#tpu.dimension_semantics<parallel>, #tpu.dimension_semantics<arbitrary>], iteration_bounds = array<i64: 2, 1>, scalar_prefetch = 0 : i64, scratch_operands = 0 : i64, tpu.core_type = #tpu.core_type<tc>, window_params = [{transform_indices = @transform_0, window_bounds = array<i64: 64, 145>}, {pipeline_mode = #tpu.pipeline_mode<synchronous>, transform_indices = @transform_1, window_bounds = array<i64: 145, 128>}, {transform_indices = @transform_2, window_bounds = array<i64: 64, 128>}, {transform_indices = @transform_3, window_bounds = array<i64: 8, 128>}, {transform_indices = @transform_4, window_bounds = array<i64: 8, 128>}]} {
    %c0_i32 = arith.constant 0 : i32
    %0 = arith.cmpi eq, %arg1, %c0_i32 : i32
    %1 = arith.extui %0 : i1 to i32
    %c0_i32_0 = arith.constant 0 : i32
    %2 = arith.cmpi ne, %1, %c0_i32_0 : i32
    scf.if %2 {
      %cst_17 = arith.constant 0.000000e+00 : f32
      %20 = vector.broadcast %cst_17 : f32 to vector<8x128xf32>
      %c0_18 = arith.constant 0 : index
      %c0_19 = arith.constant 0 : index
      %21 = vector.load %arg5[%c0_18, %c0_19] : memref<8x128xf32, #tpu.memory_space<vmem>>, vector<8x128xf32>
      tpu.vector_store %arg5[%c0_18, %c0_19], %20 {strides = array<i32>} : memref<8x128xf32, #tpu.memory_space<vmem>>, vector<8x128xf32>,
      %cst_20 = arith.constant 0.000000e+00 : f32
      %22 = vector.broadcast %cst_20 : f32 to vector<8x128xf32>
      %c0_21 = arith.constant 0 : index
      %c0_22 = arith.constant 0 : index
      %23 = vector.load %arg6[%c0_21, %c0_22] : memref<8x128xf32, #tpu.memory_space<vmem>>, vector<8x128xf32>
      tpu.vector_store %arg6[%c0_21, %c0_22], %22 {strides = array<i32>} : memref<8x128xf32, #tpu.memory_space<vmem>>, vector<8x128xf32>,
    } else {
    }
    %c0 = arith.constant 0 : index
    %c0_1 = arith.constant 0 : index
    %3 = vector.load %arg2[%c0, %c0_1] : memref<64x145xf32, #tpu.memory_space<vmem>>, vector<64x145xf32>
    %c0_2 = arith.constant 0 : index
    %c0_3 = arith.constant 0 : index
    %4 = vector.load %arg3[%c0_2, %c0_3] : memref<145x128xf32, #tpu.memory_space<vmem>>, vector<145x128xf32>
    %cst = arith.constant dense<0.000000e+00> : vector<64x128xf32>
    %5 = tpu.matmul %3, %4, %cst {dimension_numbers = #tpu.dot_dimension_numbers<[1], [0], [0], [1], [0, 0, 1, 1], [], []>} : vector<64x145xf32>, vector<145x128xf32>, vector<64x128xf32> -> vector<64x128xf32>
    %cst_4 = arith.constant 0.000000e+00 : f32
    %6 = vector.broadcast %cst_4 : f32 to vector<64x128xf32>
    %7 = arith.maximumf %5, %6 : vector<64x128xf32>
    %c0_5 = arith.constant 0 : index
    %c0_6 = arith.constant 0 : index
    %8 = vector.load %arg5[%c0_5, %c0_6] : memref<8x128xf32, #tpu.memory_space<vmem>>, vector<1x128xf32>
    %cst_7 = arith.constant dense<0.000000e+00> : vector<128xf32>
    %9 = vector.multi_reduction <add>, %7, %cst_7 [0] : vector<64x128xf32> to vector<128xf32>
    %10 = vector.shape_cast %9 : vector<128xf32> to vector<1x128xf32>
    %11 = arith.addf %8, %10 : vector<1x128xf32>
    %c0_8 = arith.constant 0 : index
    %c0_9 = arith.constant 0 : index
    %12 = vector.load %arg5[%c0_8, %c0_9] : memref<8x128xf32, #tpu.memory_space<vmem>>, vector<1x128xf32>
    tpu.vector_store %arg5[%c0_8, %c0_9], %11 {strides = array<i32>} : memref<8x128xf32, #tpu.memory_space<vmem>>, vector<1x128xf32>,
    %c0_10 = arith.constant 0 : index
    %c0_11 = arith.constant 0 : index
    %13 = vector.load %arg6[%c0_10, %c0_11] : memref<8x128xf32, #tpu.memory_space<vmem>>, vector<1x128xf32>
    %14 = arith.mulf %7, %7 : vector<64x128xf32>
    %cst_12 = arith.constant dense<0.000000e+00> : vector<128xf32>
    %15 = vector.multi_reduction <add>, %14, %cst_12 [0] : vector<64x128xf32> to vector<128xf32>
    %16 = vector.shape_cast %15 : vector<128xf32> to vector<1x128xf32>
    %17 = arith.addf %13, %16 : vector<1x128xf32>
    %c0_13 = arith.constant 0 : index
    %c0_14 = arith.constant 0 : index
    %18 = vector.load %arg6[%c0_13, %c0_14] : memref<8x128xf32, #tpu.memory_space<vmem>>, vector<1x128xf32>
    tpu.vector_store %arg6[%c0_13, %c0_14], %17 {strides = array<i32>} : memref<8x128xf32, #tpu.memory_space<vmem>>, vector<1x128xf32>,
    %c0_15 = arith.constant 0 : index
    %c0_16 = arith.constant 0 : index
    %19 = vector.load %arg4[%c0_15, %c0_16] : memref<64x128xf32, #tpu.memory_space<vmem>>, vector<64x128xf32>
    tpu.vector_store %arg4[%c0_15, %c0_16], %7 {strides = array<i32>} : memref<64x128xf32, #tpu.memory_space<vmem>>, vector<64x128xf32>,
    return
  }
  func.func @transform_0(%arg0: i32, %arg1: i32) -> (i32, i32) {
    %c1_i32 = arith.constant 1 : i32
    %0 = arith.muli %arg0, %c1_i32 : i32
    %1 = arith.addi %0, %arg1 : i32
    %c0_i32 = arith.constant 0 : i32
    %c0_i32_0 = arith.constant 0 : i32
    return %1, %c0_i32 : i32, i32
  }
  func.func @transform_1(%arg0: i32, %arg1: i32) -> (i32, i32) {
    %c0_i32 = arith.constant 0 : i32
    %c0_i32_0 = arith.constant 0 : i32
    %c0_i32_1 = arith.constant 0 : i32
    return %c0_i32, %c0_i32_0 : i32, i32
  }
  func.func @transform_2(%arg0: i32, %arg1: i32) -> (i32, i32) {
    %c1_i32 = arith.constant 1 : i32
    %0 = arith.muli %arg0, %c1_i32 : i32
    %1 = arith.addi %0, %arg1 : i32
    %c0_i32 = arith.constant 0 : i32
    %c0_i32_0 = arith.constant 0 : i32
    return %1, %c0_i32 : i32, i32
  }
  func.func @transform_3(%arg0: i32, %arg1: i32) -> (i32, i32) {
    %c0_i32 = arith.constant 0 : i32
    %c0_i32_0 = arith.constant 0 : i32
    return %arg0, %c0_i32 : i32, i32
  }
  func.func @transform_4(%arg0: i32, %arg1: i32) -> (i32, i32) {
    %c0_i32 = arith.constant 0 : i32
    %c0_i32_0 = arith.constant 0 : i32
    return %arg0, %c0_i32 : i32, i32
  }
}

module attributes {stable_mosaic.version = 11 : i64} {
  func.func @bn_apply_kernel(%arg0: i32, %arg1: memref<64x128xf32, #tpu.memory_space<vmem>>, %arg2: memref<2x128xf32, #tpu.memory_space<vmem>>, %arg3: memref<64x128xf32, #tpu.memory_space<vmem>>) attributes {dimension_semantics = [#tpu.dimension_semantics<parallel>], iteration_bounds = array<i64: 2>, scalar_prefetch = 0 : i64, scratch_operands = 0 : i64, tpu.core_type = #tpu.core_type<tc>, window_params = [{transform_indices = @transform_0, window_bounds = array<i64: 64, 128>}, {pipeline_mode = #tpu.pipeline_mode<synchronous>, transform_indices = @transform_1, window_bounds = array<i64: 2, 128>}, {transform_indices = @transform_2, window_bounds = array<i64: 64, 128>}]} {
    %c0 = arith.constant 0 : index
    %c0_0 = arith.constant 0 : index
    %0 = vector.load %arg1[%c0, %c0_0] : memref<64x128xf32, #tpu.memory_space<vmem>>, vector<64x128xf32>
    %c0_1 = arith.constant 0 : index
    %c0_2 = arith.constant 0 : index
    %1 = vector.load %arg2[%c0_1, %c0_2] : memref<2x128xf32, #tpu.memory_space<vmem>>, vector<1x128xf32>
    %c1 = arith.constant 1 : index
    %c0_3 = arith.constant 0 : index
    %2 = vector.load %arg2[%c1, %c0_3] : memref<2x128xf32, #tpu.memory_space<vmem>>, vector<1x128xf32>
    %3 = vector.broadcast %1 : vector<1x128xf32> to vector<64x128xf32>
    %4 = arith.mulf %0, %3 : vector<64x128xf32>
    %5 = vector.broadcast %2 : vector<1x128xf32> to vector<64x128xf32>
    %6 = arith.addf %4, %5 : vector<64x128xf32>
    %c0_4 = arith.constant 0 : index
    %c0_5 = arith.constant 0 : index
    %7 = vector.load %arg3[%c0_4, %c0_5] : memref<64x128xf32, #tpu.memory_space<vmem>>, vector<64x128xf32>
    tpu.vector_store %arg3[%c0_4, %c0_5], %6 {strides = array<i32>} : memref<64x128xf32, #tpu.memory_space<vmem>>, vector<64x128xf32>,
    return
  }
  func.func @transform_0(%arg0: i32) -> (i32, i32) {
    %c0_i32 = arith.constant 0 : i32
    %c0_i32_0 = arith.constant 0 : i32
    return %arg0, %c0_i32 : i32, i32
  }
  func.func @transform_1(%arg0: i32) -> (i32, i32) {
    %c0_i32 = arith.constant 0 : i32
    %c0_i32_0 = arith.constant 0 : i32
    %c0_i32_1 = arith.constant 0 : i32
    return %c0_i32, %c0_i32_0 : i32, i32
  }
  func.func @transform_2(%arg0: i32) -> (i32, i32) {
    %c0_i32 = arith.constant 0 : i32
    %c0_i32_0 = arith.constant 0 : i32
    return %arg0, %c0_i32 : i32, i32
  }
}

</mosaic_0001>

<llo_original>
// kernel: tile.18
$region0: #{tile.18}
  #allocation0 [shape = 's32[1]{0}', space=sflag, size = 0x4, scoped, tag = 'scoped memory for tile.18']
  %s0 = inlined_call_operand.vmem [shape: f32[8], index: 0, kind: input, shape index: {}]
  %s1 = inlined_call_operand.vmem [shape: f32[16,8], index: 1, kind: output, shape index: {}]
  // Predicated region
  $region2: #{tile.18} parent=0 // pred_check
    _
  $region3: #{tile.18} parent=0 // pred_check_branch
    %3 = sbr.rel (0) target = $region5
  $region4: #{tile.18} parent=0 // pred_region
    _
  $region5: #{tile.18} parent=0 // pred_fallthru
    _
  %v4 = vld [vmem:[%s0] ss:$0 sm:$0xff]
  %5 = vst [vmem:[%s1] sm:$0xff] %v4
  %s6 = scalar_lea.vmem %s1, 8
  %7 = vst [vmem:[%s6] sm:$0xff] %v4

// kernel: trans_conv_forward.2
$region0: #{trans_conv_forward.2}
  #allocation0 [shape = 'u32[]', space=smem, size = 0x4, offset = 0x4, fixed_abs, tag = 'smem constant byte address 0x4 - core index']
  #allocation1 [shape = 'u32[72,128]{1,0:T(1,128)}', space=vmem, size = 0x9000, scoped, tag = 'internal scratch']
  %s0 = inlined_call_operand.vmem [shape: f32[128,145], index: 0, kind: input, shape index: {}]
  %s1 = inlined_call_operand.vmem [shape: f32[145,128], index: 1, kind: input, shape index: {}]
  %s2 = inlined_call_operand.vmem [shape: f32[128,128], index: 2, kind: output, shape index: {0}]
  %s3 = inlined_call_operand.vmem [shape: f32[16,128], index: 3, kind: output, shape index: {1}]
  %s4 = inlined_call_operand.vmem [shape: f32[16,128], index: 4, kind: output, shape index: {2}]
  %5 = xla_tuple %s2, %s3, %s4
  %s6 = sld [smem:[#allocation0]]
  $region61: #{trans_conv_forward.2} parent=0
    _
  %s8 = ssub.s32 1, %s6
  %s9 = scalar_select 0, %s8, %s6
  loop: start=0, step=1, limit=4
  $region2: #{trans_conv_forward.2} parent=0 // loop_pre_header
    _
  $region3: #{trans_conv_forward.2} parent=0 // loop_header
    %s11 = sphi 0, %s15
    %p12 = scmp.ge.s32.totalorder %s11, 4
    %s18 = sphi 0, %s30
    %s19 = sphi 0, %s26
    %s20 = sphi 0, %s18
    %s21 = sphi 0, %s19
    %s22 = sphi 0, %s20
    %s23 = sphi 0, %s21
    %s35 = sphi 0, %s37
    %s38 = sphi 0, %s35
    %s39 = sphi 0, %s38
    %s55 = sphi 0, %s39
    %s59 = sphi 0, %s59
    %s61 = sphi 0, %s59
    %s62 = sphi 0, %s61
    %s76 = sphi 0, %s62
    %s84 = sphi 0, %s86
    %s87 = sphi 0, %s84
    %s88 = sphi 0, %s87
    %s104 = sphi 0, %s88
    %s110 = sphi 0, %s112
    %s113 = sphi 0, %s110
    %s114 = sphi 0, %s113
    %s130 = sphi 0, %s114
    %s136 = sphi 0, %s138
    %s139 = sphi 0, %s136
    %s140 = sphi 0, %s139
    %s156 = sphi 0, %s140
  $region4: #{trans_conv_forward.2} parent=0 // loop_header_branch
    %14 = sbr.rel (%p12) target = $region8
  $region5: #{trans_conv_forward.2} parent=0 // loop_body
    %s16 = ssub.s32 %s11, 1
    %s17 = ssub.s32 %s11, 2
    %s24 = sadd.s32 1, %s19
    %p25 = scmp.ge.s32.totalorder %s24, 1
    %s26 = scalar_select %p25, 0, %s24
    %s27 = sadd.s32 1, %s18
    %s28 = scalar_select %p25, %s27, %s18
    %p29 = scmp.ge.s32.totalorder %s28, 2
    %s30 = scalar_select %p29, 0, %s28
    %s31 = sadd.s32 %s18, %s19
    %s32 = sadd.s32 %s30, %s26
    %s33 = ssub.s32 %s31, %s32
    %p34 = scmp.eq.s32.totalorder %s33, 0
    %s36 = sadd.s32 %s35, 1
    %s37 = scalar_select %p34, %s35, %s36
    %p40 = pneg %p34
    %p41 = scmp.eq.s32.totalorder %s11, 1
    %p42 = por %p40, %p41
    %p43 = scmp.ne.s32.totalorder %s35, %s38
    %p44 = scmp.eq.s32.totalorder %s11, 0
    %p45 = por %p43, %p44
    %p46 = scmp.ne.s32.totalorder %s35, %s38
    %p47 = scmp.eq.s32.totalorder %s16, 1
    %p48 = por %p46, %p47
    %p49 = scmp.ne.s32.totalorder %s38, %s39
    %p50 = scmp.eq.s32.totalorder %s16, 0
    %p51 = por %p49, %p50
    %p52 = scmp.ne.s32.totalorder %s38, %s39
    %p53 = scmp.eq.s32.totalorder %s17, 1
    %p54 = por %p52, %p53
    %p56 = scmp.ne.s32.totalorder %s39, %s55
    %p57 = scmp.eq.s32.totalorder %s17, 0
    %p58 = por %p56, %p57
    %s60 = sadd.s32 %s59, 1
    %p63 = scmp.eq.s32.totalorder %s11, 1
    %p64 = scmp.ne.s32.totalorder %s59, %s61
    %p65 = scmp.eq.s32.totalorder %s11, 0
    %p66 = por %p64, %p65
    %p67 = scmp.ne.s32.totalorder %s59, %s61
    %p68 = scmp.eq.s32.totalorder %s16, 1
    %p69 = por %p67, %p68
    %p70 = scmp.ne.s32.totalorder %s61, %s62
    %p71 = scmp.eq.s32.totalorder %s16, 0
    %p72 = por %p70, %p71
    %p73 = scmp.ne.s32.totalorder %s61, %s62
    %p74 = scmp.eq.s32.totalorder %s17, 1
    %p75 = por %p73, %p74
    %p77 = scmp.ne.s32.totalorder %s62, %s76
    %p78 = scmp.eq.s32.totalorder %s17, 0
    %p79 = por %p77, %p78
    %s80 = sadd.s32 %s18, %s19
    %s81 = sadd.s32 %s30, %s26
    %s82 = ssub.s32 %s80, %s81
    %p83 = scmp.eq.s32.totalorder %s82, 0
    %s85 = sadd.s32 %s84, 1
    %s86 = scalar_select %p83, %s84, %s85
    %p89 = pneg %p83
    %p90 = scmp.eq.s32.totalorder %s11, 1
    %p91 = por %p89, %p90
    %p92 = scmp.ne.s32.totalorder %s84, %s87
    %p93 = scmp.eq.s32.totalorder %s11, 0
    %p94 = por %p92, %p93
    %p95 = scmp.ne.s32.totalorder %s84, %s87
    %p96 = scmp.eq.s32.totalorder %s16, 1
    %p97 = por %p95, %p96
    %p98 = scmp.ne.s32.totalorder %s87, %s88
    %p99 = scmp.eq.s32.totalorder %s16, 0
    %p100 = por %p98, %p99
    %p101 = scmp.ne.s32.totalorder %s87, %s88
    %p102 = scmp.eq.s32.totalorder %s17, 1
    %p103 = por %p101, %p102
    %p105 = scmp.ne.s32.totalorder %s88, %s104
    %p106 = scmp.eq.s32.totalorder %s17, 0
    %p107 = por %p105, %p106
    %s108 = ssub.s32 %s18, %s30
    %p109 = scmp.eq.s32.totalorder %s108, 0
    %s111 = sadd.s32 %s110, 1
    %s112 = scalar_select %p109, %s110, %s111
    %p115 = pneg %p109
    %p116 = scmp.eq.s32.totalorder %s11, 1
    %p117 = por %p115, %p116
    %p118 = scmp.ne.s32.totalorder %s110, %s113
    %p119 = scmp.eq.s32.totalorder %s11, 0
    %p120 = por %p118, %p119
    %p121 = scmp.ne.s32.totalorder %s110, %s113
    %p122 = scmp.eq.s32.totalorder %s16, 1
    %p123 = por %p121, %p122
    %p124 = scmp.ne.s32.totalorder %s113, %s114
    %p125 = scmp.eq.s32.totalorder %s16, 0
    %p126 = por %p124, %p125
    %p127 = scmp.ne.s32.totalorder %s113, %s114
    %p128 = scmp.eq.s32.totalorder %s17, 1
    %p129 = por %p127, %p128
    %p131 = scmp.ne.s32.totalorder %s114, %s130
    %p132 = scmp.eq.s32.totalorder %s17, 0
    %p133 = por %p131, %p132
    %s134 = ssub.s32 %s18, %s30
    %p135 = scmp.eq.s32.totalorder %s134, 0
    %s137 = sadd.s32 %s136, 1
    %s138 = scalar_select %p135, %s136, %s137
    %p141 = pneg %p135
    %p142 = scmp.eq.s32.totalorder %s11, 1
    %p143 = por %p141, %p142
    %p144 = scmp.ne.s32.totalorder %s136, %s139
    %p145 = scmp.eq.s32.totalorder %s11, 0
    %p146 = por %p144, %p145
    %p147 = scmp.ne.s32.totalorder %s136, %s139
    %p148 = scmp.eq.s32.totalorder %s16, 1
    %p149 = por %p147, %p148
    %p150 = scmp.ne.s32.totalorder %s139, %s140
    %p151 = scmp.eq.s32.totalorder %s16, 0
    %p152 = por %p150, %p151
    %p153 = scmp.ne.s32.totalorder %s139, %s140
    %p154 = scmp.eq.s32.totalorder %s17, 1
    %p155 = por %p153, %p154
    %p157 = scmp.ne.s32.totalorder %s140, %s156
    %p158 = scmp.eq.s32.totalorder %s17, 0
    %p159 = por %p157, %p158
    %p160 = scmp.le.s32.totalorder 1, %s11
    %p161 = scmp.lt.s32.totalorder %s11, 3
    %p162 = pnand %p160, %p161
    %p163 = pneg %p162
    // Predicated region
    $region9: #{trans_conv_forward.2} parent=5 // pred_check
      _
    $region10: #{trans_conv_forward.2} parent=5 // pred_check_branch
      %165 = sbr.rel (%p162) target = $region12
    $region11: #{trans_conv_forward.2} parent=5 // pred_region
      %s166 = ssub.s32 %s11, 1
      // Predicated region
      $region13: #{trans_conv_forward.2} parent=11 // pred_check
        %p167 = pneg %p72
      $region14: #{trans_conv_forward.2} parent=11 // pred_check_branch
        %169 = sbr.rel (%p167) target = $region16
      $region15: #{trans_conv_forward.2} parent=11 // pred_region
        _
      $region16: #{trans_conv_forward.2} parent=11 // pred_fallthru
        _
    $region12: #{trans_conv_forward.2} parent=5 // pred_fallthru
      _
    %p170 = scmp.lt.s32.totalorder %s11, 2
    // Predicated region
    $region17: #{trans_conv_forward.2} parent=5 // pred_check
      %p171 = pneg %p170
    $region18: #{trans_conv_forward.2} parent=5 // pred_check_branch
      %173 = sbr.rel (%p171) target = $region20
    $region19: #{trans_conv_forward.2} parent=5 // pred_region
      // Predicated region
      $region21: #{trans_conv_forward.2} parent=19 // pred_check
        %p174 = pneg %p45
      $region22: #{trans_conv_forward.2} parent=19 // pred_check_branch
        %176 = sbr.rel (%p174) target = $region24
      $region23: #{trans_conv_forward.2} parent=19 // pred_region
        %s177 = sadd.s32 %s18, %s19
        %s178 = smul.u32 8, %s177
        %p179 = scmp.lt.s32.totalorder %s178, 15
        %s180 = scalar_select %p179, %s178, 15
        %s181 = smul.addr %s180, 2
        %s182 = smul.addr %s181, 8
        %s183 = scalar_lea.vmem %s0, %s182
        %s184 = sadd.s32 %s18, %s19
        %s185 = smul.u32 8, %s184
      $region24: #{trans_conv_forward.2} parent=19 // pred_fallthru
        _
    $region20: #{trans_conv_forward.2} parent=5 // pred_fallthru
      _
    %p186 = scmp.le.s32.totalorder 1, %s11
    %p187 = scmp.lt.s32.totalorder %s11, 3
    %p188 = pnand %p186, %p187
    %p189 = pneg %p188
    // Predicated region
    $region25: #{trans_conv_forward.2} parent=5 // pred_check
      _
    $region26: #{trans_conv_forward.2} parent=5 // pred_check_branch
      %191 = sbr.rel (%p188) target = $region28
    $region27: #{trans_conv_forward.2} parent=5 // pred_region
      %s192 = ssub.s32 %s11, 1
      %s193 = sadd.s32 %s20, %s21
      %s194 = smul.u32 8, %s193
      %p195 = scmp.lt.s32.totalorder %s194, 15
      %s196 = scalar_select %p195, %s194, 15
      %s197 = smul.addr %s196, 2
      %s198 = smul.addr %s197, 8
      %s199 = scalar_lea.vmem %s0, %s198
      %p200 = pneg %p51
      %p201 = pneg %p48
      %p202 = pneg %p72
      %p203 = pneg %p69
      %p204 = pneg %p100
      %p205 = pneg %p97
      %s206 = sadd.s32 %s20, %s21
      %s207 = smul.u32 8, %s206
      %p208 = scmp.lt.s32.totalorder %s207, 15
      %s209 = scalar_select %p208, %s207, 15
      %s210 = smul.addr %s209, 8
      %s211 = scalar_lea.vmem %s2, %s210
      %p212 = pneg %p126
      %p213 = pneg %p123
      %p214 = scmp.lt.s32.totalorder %s20, 1
      %s215 = scalar_select %p214, %s20, 1
      %s216 = smul.addr %s215, 8
      %s217 = scalar_lea.vmem %s3, %s216
      %p218 = pneg %p152
      %p219 = pneg %p149
      %p220 = scmp.lt.s32.totalorder %s20, 1
      %s221 = scalar_select %p220, %s20, 1
      %s222 = smul.addr %s221, 8
      %s223 = scalar_lea.vmem %s4, %s222
      %s224 = sadd.s32 %s20, %s21
      %s225 = smul.u32 8, %s224
      %p226 = scmp.lt.s32.totalorder %s225, 15
      %s227 = scalar_select %p226, %s225, 15
      %s228 = smul.addr %s227, 2
      %s229 = smul.addr %s228, 8
      %s230 = scalar_lea.vmem %s0, %s229
      %s231 = sadd.s32 %s20, %s21
      %s232 = smul.u32 8, %s231
      %s233 = sadd.s32 %s20, %s21
      %s234 = smul.u32 8, %s233
      %p235 = scmp.lt.s32.totalorder %s234, 15
      %s236 = scalar_select %p235, %s234, 15
      %s237 = smul.addr %s236, 8
      %s238 = scalar_lea.vmem %s2, %s237
      %s239 = sadd.s32 %s20, %s21
      %s240 = smul.u32 8, %s239
      %p241 = scmp.lt.s32.totalorder %s20, 1
      %s242 = scalar_select %p241, %s20, 1
      %s243 = smul.addr %s242, 8
      %s244 = scalar_lea.vmem %s3, %s243
      %p245 = scmp.lt.s32.totalorder %s20, 1
      %s246 = scalar_select %p245, %s20, 1
      %s247 = smul.addr %s246, 8
      %s248 = scalar_lea.vmem %s4, %s247
      %p249 = scmp.eq.s32.totalorder %s21, 0
      // Predicated region
      $region29: #{trans_conv_forward.2} parent=27 // pred_check
        %p250 = pneg %p249
      $region30: #{trans_conv_forward.2} parent=27 // pred_check_branch
        %252 = sbr.rel (%p250) target = $region32
      $region31: #{trans_conv_forward.2} parent=27 // pred_region
        %253 = vst [vmem:[%s244] sm:$0xff] 0.0
        %254 = vst [vmem:[%s248] sm:$0xff] 0.0
      $region32: #{trans_conv_forward.2} parent=27 // pred_fallthru
        _
      %v255 = vld [vmem:[%s230] sm:$0xff]
      %v256 = vld [vmem:[%s230 + $0x8] sm:$0xff]
      %v257 = vld [vmem:[%s230 + $0x10] sm:$0xff]
      %v258 = vld [vmem:[%s230 + $0x18] sm:$0xff]
      %v259 = vld [vmem:[%s230 + $0x20] sm:$0xff]
      %v260 = vld [vmem:[%s230 + $0x28] sm:$0xff]
      %v261 = vld [vmem:[%s230 + $0x30] sm:$0xff]
      %v262 = vld [vmem:[%s230 + $0x38] sm:$0xff]
      %v263 = vld [vmem:[%s230 + $0x40] sm:$0xff]
      %v264 = vld [vmem:[%s230 + $0x48] sm:$0xff]
      %v265 = vld [vmem:[%s230 + $0x50] sm:$0xff]
      %v266 = vld [vmem:[%s230 + $0x58] sm:$0xff]
      %v267 = vld [vmem:[%s230 + $0x60] sm:$0xff]
      %v268 = vld [vmem:[%s230 + $0x68] sm:$0xff]
      %v269 = vld [vmem:[%s230 + $0x70] sm:$0xff]
      %v270 = vld [vmem:[%s230 + $0x78] sm:$0xff]
      %v271 = vld [vmem:[%s1] sm:$0xff]
      %v272 = vld [vmem:[%s1 + $0x8] sm:$0xff]
      %v273 = vld [vmem:[%s1 + $0x10] sm:$0xff]
      %v274 = vld [vmem:[%s1 + $0x18] sm:$0xff]
      %v275 = vld [vmem:[%s1 + $0x20] sm:$0xff]
      %v276 = vld [vmem:[%s1 + $0x28] sm:$0xff]
      %v277 = vld [vmem:[%s1 + $0x30] sm:$0xff]
      %v278 = vld [vmem:[%s1 + $0x38] sm:$0xff]
      %v279 = vld [vmem:[%s1 + $0x40] sm:$0xff]
      %v280 = vld [vmem:[%s1 + $0x48] sm:$0xff]
      %v281 = vld [vmem:[%s1 + $0x50] sm:$0xff]
      %v282 = vld [vmem:[%s1 + $0x58] sm:$0xff]
      %v283 = vld [vmem:[%s1 + $0x60] sm:$0xff]
      %v284 = vld [vmem:[%s1 + $0x68] sm:$0xff]
      %v285 = vld [vmem:[%s1 + $0x70] sm:$0xff]
      %v286 = vld [vmem:[%s1 + $0x78] sm:$0xff]
      %v287 = vld [vmem:[%s1 + $0x80] sm:$0xff]
      %v288 = vld [vmem:[%s1 + $0x88] sm:$0xff]
      %v289 = vld [vmem:[%s1 + $0x90] sm:$0x1]
      %vm290 = vcmask 138240
      %v292 = vsel %vm290, %v256, 0
      %v295 = vsel %vm290, %v258, 0
      %v298 = vsel %vm290, %v260, 0
      %v301 = vsel %vm290, %v262, 0
      %v304 = vsel %vm290, %v264, 0
      %v307 = vsel %vm290, %v266, 0
      %v310 = vsel %vm290, %v268, 0
      %v313 = vsel %vm290, %v270, 0
      %vm315 = vcmask 1040384
      %v317 = vsel %vm315, %v289, 0
      %319 = vmatpush.msra.mxu0 %v286
      %320 = vmatpush.msra.mxu0 %v285
      %321 = vmatpush.msra.mxu0 %v284
      %322 = vmatpush.msra.mxu0 %v283
      %323 = vmatpush.msra.mxu0 %v282
      %324 = vmatpush.msra.mxu0 %v281
      %325 = vmatpush.msra.mxu0 %v280
      %326 = vmatpush.msra.mxu0 %v279
      %327 = vmatpush.msra.mxu0 %v278
      %328 = vmatpush.msra.mxu0 %v277
      %329 = vmatpush.msra.mxu0 %v276
      %330 = vmatpush.msra.mxu0 %v275
      %331 = vmatpush.msra.mxu0 %v274
      %332 = vmatpush.msra.mxu0 %v273
      %333 = vmatpush.msra.mxu0 %v272
      %334 = vmatpush.msra.mxu0 %v271
      %335 = vmatmul.f32.gmra.mxu0 %v255
      %v336 = vpop.f32.mrf.mxu0
      %v337 = vadd.f32 0.0, %v336
      %338 = vmatmul.f32.gmra.mxu0 %v257
      %v339 = vpop.f32.mrf.mxu0
      %v340 = vadd.f32 0.0, %v339
      %341 = vmatmul.f32.gmra.mxu0 %v259
      %v342 = vpop.f32.mrf.mxu0
      %v343 = vadd.f32 0.0, %v342
      %344 = vmatmul.f32.gmra.mxu0 %v261
      %v345 = vpop.f32.mrf.mxu0
      %v346 = vadd.f32 0.0, %v345
      %347 = vmatmul.f32.gmra.mxu0 %v263
      %v348 = vpop.f32.mrf.mxu0
      %v349 = vadd.f32 0.0, %v348
      %350 = vmatmul.f32.gmra.mxu0 %v265
      %v351 = vpop.f32.mrf.mxu0
      %v352 = vadd.f32 0.0, %v351
      %353 = vmatmul.f32.gmra.mxu0 %v267
      %v354 = vpop.f32.mrf.mxu0
      %v355 = vadd.f32 0.0, %v354
      %356 = vmatmul.f32.gmra.mxu0 %v269
      %v357 = vpop.f32.mrf.mxu0
      %v358 = vadd.f32 0.0, %v357
      %359 = vdwg.mxu0
      %360 = vmatpush.msra.mxu0 0.0
      %361 = vmatpush.msra.mxu0 0.0
      %362 = vmatpush.msra.mxu0 0.0
      %363 = vmatpush.msra.mxu0 0.0
      %364 = vmatpush.msra.mxu0 0.0
      %365 = vmatpush.msra.mxu0 0.0
      %366 = vmatpush.msra.mxu0 0.0
      %367 = vmatpush.msra.mxu0 0.0
      %368 = vmatpush.msra.mxu0 0.0
      %369 = vmatpush.msra.mxu0 0.0
      %370 = vmatpush.msra.mxu0 0.0
      %371 = vmatpush.msra.mxu0 0.0
      %372 = vmatpush.msra.mxu0 0.0
      %373 = vmatpush.msra.mxu0 %v317
      %374 = vmatpush.msra.mxu0 %v288
      %375 = vmatpush.msra.mxu0 %v287
      %376 = vmatmul.f32.gmra.mxu0 %v292
      %v377 = vpop.f32.mrf.mxu0
      %v378 = vadd.f32 %v337, %v377
      %379 = vmatmul.f32.gmra.mxu0 %v295
      %v380 = vpop.f32.mrf.mxu0
      %v381 = vadd.f32 %v340, %v380
      %382 = vmatmul.f32.gmra.mxu0 %v298
      %v383 = vpop.f32.mrf.mxu0
      %v384 = vadd.f32 %v343, %v383
      %385 = vmatmul.f32.gmra.mxu0 %v301
      %v386 = vpop.f32.mrf.mxu0
      %v387 = vadd.f32 %v346, %v386
      %388 = vmatmul.f32.gmra.mxu0 %v304
      %v389 = vpop.f32.mrf.mxu0
      %v390 = vadd.f32 %v349, %v389
      %391 = vmatmul.f32.gmra.mxu0 %v307
      %v392 = vpop.f32.mrf.mxu0
      %v393 = vadd.f32 %v352, %v392
      %394 = vmatmul.f32.gmra.mxu0 %v310
      %v395 = vpop.f32.mrf.mxu0
      %v396 = vadd.f32 %v355, %v395
      %397 = vmatmul.f32.gmra.mxu0 %v313
      %v398 = vpop.f32.mrf.mxu0
      %v399 = vadd.f32 %v358, %v398
      %400 = vdwg.mxu0
      %v401 = vmax.f32 %v378, 0.0
      %v402 = vmax.f32 %v381, 0.0
      %v403 = vmax.f32 %v384, 0.0
      %v404 = vmax.f32 %v387, 0.0
      %v405 = vmax.f32 %v390, 0.0
      %v406 = vmax.f32 %v393, 0.0
      %v407 = vmax.f32 %v396, 0.0
      %v408 = vmax.f32 %v399, 0.0
      %v409 = vld [vmem:[%s244] sm:$0x1]
      %v410 = vadd.f32 %v401, %v402
      %v411 = vadd.f32 %v410, %v403
      %v412 = vadd.f32 %v411, %v404
      %v413 = vadd.f32 %v412, %v405
      %v414 = vadd.f32 %v413, %v406
      %v415 = vadd.f32 %v414, %v407
      %v416 = vadd.f32 %v415, %v408
      %v417 = vrot.slane %v416, 4
      %v418 = vadd.f32 %v416, %v417
      %v419 = vrot.slane %v418, 2
      %v420 = vadd.f32 %v418, %v419
      %v421 = vrot.slane %v420, 1
      %v422 = vadd.f32 %v420, %v421
      %v423 = vadd.f32 %v409, %v422
      %424 = vst [vmem:[%s244] sm:$0x1] %v423
      %v425 = vld [vmem:[%s248] sm:$0x1]
      %v426 = vmul.f32 %v401, %v401
      %v427 = vmul.f32 %v402, %v402
      %v428 = vmul.f32 %v403, %v403
      %v429 = vmul.f32 %v404, %v404
      %v430 = vmul.f32 %v405, %v405
      %v431 = vmul.f32 %v406, %v406
      %v432 = vmul.f32 %v407, %v407
      %v433 = vmul.f32 %v408, %v408
      %v434 = vadd.f32 %v426, %v427
      %v435 = vadd.f32 %v434, %v428
      %v436 = vadd.f32 %v435, %v429
      %v437 = vadd.f32 %v436, %v430
      %v438 = vadd.f32 %v437, %v431
      %v439 = vadd.f32 %v438, %v432
      %v440 = vadd.f32 %v439, %v433
      %v441 = vrot.slane %v440, 4
      %v442 = vadd.f32 %v440, %v441
      %v443 = vrot.slane %v442, 2
      %v444 = vadd.f32 %v442, %v443
      %v445 = vrot.slane %v444, 1
      %v446 = vadd.f32 %v444, %v445
      %v447 = vadd.f32 %v425, %v446
      %448 = vst [vmem:[%s248] sm:$0x1] %v447
      %449 = vst [vmem:[%s238] sm:$0xff] %v401
      %450 = vst [vmem:[%s238 + $0x8] sm:$0xff] %v402
      %451 = vst [vmem:[%s238 + $0x10] sm:$0xff] %v403
      %452 = vst [vmem:[%s238 + $0x18] sm:$0xff] %v404
      %453 = vst [vmem:[%s238 + $0x20] sm:$0xff] %v405
      %454 = vst [vmem:[%s238 + $0x28] sm:$0xff] %v406
      %455 = vst [vmem:[%s238 + $0x30] sm:$0xff] %v407
      %456 = vst [vmem:[%s238 + $0x38] sm:$0xff] %v408
      %s457 = sadd.s32 %s20, %s21
      %s458 = smul.u32 8, %s457
      %p459 = scmp.lt.s32.totalorder %s458, 15
      %s460 = scalar_select %p459, %s458, 15
      %s461 = smul.addr %s460, 8
      %s462 = scalar_lea.vmem %s2, %s461
      %p463 = scmp.lt.s32.totalorder %s20, 1
      %s464 = scalar_select %p463, %s20, 1
      %s465 = smul.addr %s464, 8
      %s466 = scalar_lea.vmem %s3, %s465
      %p467 = scmp.lt.s32.totalorder %s20, 1
      %s468 = scalar_select %p467, %s20, 1
      %s469 = smul.addr %s468, 8
      %s470 = scalar_lea.vmem %s4, %s469
      // Predicated region
      $region33: #{trans_conv_forward.2} parent=27 // pred_check
        %p471 = pneg %p97
      $region34: #{trans_conv_forward.2} parent=27 // pred_check_branch
        %473 = sbr.rel (%p471) target = $region36
      $region35: #{trans_conv_forward.2} parent=27 // pred_region
        %s474 = sadd.s32 %s20, %s21
        %s475 = smul.u32 8, %s474
      $region36: #{trans_conv_forward.2} parent=27 // pred_fallthru
        _
      // Predicated region
      $region37: #{trans_conv_forward.2} parent=27 // pred_check
        %p476 = pneg %p123
      $region38: #{trans_conv_forward.2} parent=27 // pred_check_branch
        %478 = sbr.rel (%p476) target = $region40
      $region39: #{trans_conv_forward.2} parent=27 // pred_region
        _
      $region40: #{trans_conv_forward.2} parent=27 // pred_fallthru
        _
      // Predicated region
      $region41: #{trans_conv_forward.2} parent=27 // pred_check
        %p479 = pneg %p149
      $region42: #{trans_conv_forward.2} parent=27 // pred_check_branch
        %481 = sbr.rel (%p479) target = $region44
      $region43: #{trans_conv_forward.2} parent=27 // pred_region
        _
      $region44: #{trans_conv_forward.2} parent=27 // pred_fallthru
        _
    $region28: #{trans_conv_forward.2} parent=5 // pred_fallthru
      _
    %p482 = scmp.le.s32.totalorder 2, %s11
    // Predicated region
    $region45: #{trans_conv_forward.2} parent=5 // pred_check
      %p483 = pneg %p482
    $region46: #{trans_conv_forward.2} parent=5 // pred_check_branch
      %485 = sbr.rel (%p483) target = $region48
    $region47: #{trans_conv_forward.2} parent=5 // pred_region
      %s486 = ssub.s32 %s11, 2
      // Predicated region
      $region49: #{trans_conv_forward.2} parent=47 // pred_check
        %p487 = pneg %p103
      $region50: #{trans_conv_forward.2} parent=47 // pred_check_branch
        %489 = sbr.rel (%p487) target = $region52
      $region51: #{trans_conv_forward.2} parent=47 // pred_region
        %s490 = sadd.s32 %s22, %s23
        %s491 = smul.u32 8, %s490
        %p492 = scmp.lt.s32.totalorder %s491, 15
        %s493 = scalar_select %p492, %s491, 15
        %s494 = smul.addr %s493, 8
        %s495 = scalar_lea.vmem %s2, %s494
      $region52: #{trans_conv_forward.2} parent=47 // pred_fallthru
        _
      // Predicated region
      $region53: #{trans_conv_forward.2} parent=47 // pred_check
        %p496 = pneg %p129
      $region54: #{trans_conv_forward.2} parent=47 // pred_check_branch
        %498 = sbr.rel (%p496) target = $region56
      $region55: #{trans_conv_forward.2} parent=47 // pred_region
        %p499 = scmp.lt.s32.totalorder %s22, 1
        %s500 = scalar_select %p499, %s22, 1
        %s501 = smul.addr %s500, 8
        %s502 = scalar_lea.vmem %s3, %s501
      $region56: #{trans_conv_forward.2} parent=47 // pred_fallthru
        _
      // Predicated region
      $region57: #{trans_conv_forward.2} parent=47 // pred_check
        %p503 = pneg %p155
      $region58: #{trans_conv_forward.2} parent=47 // pred_check_branch
        %505 = sbr.rel (%p503) target = $region60
      $region59: #{trans_conv_forward.2} parent=47 // pred_region
        %p506 = scmp.lt.s32.totalorder %s22, 1
        %s507 = scalar_select %p506, %s22, 1
        %s508 = smul.addr %s507, 8
        %s509 = scalar_lea.vmem %s4, %s508
      $region60: #{trans_conv_forward.2} parent=47 // pred_fallthru
        _
    $region48: #{trans_conv_forward.2} parent=5 // pred_fallthru
      _
  $region6: #{trans_conv_forward.2} parent=0 // loop_footer
    %s15 = sadd.s32 1, %s11
  $region7: #{trans_conv_forward.2} parent=0 // loop_footer_branch
    %10 = sbr.rel target = $region3
  $region8: #{trans_conv_forward.2} parent=0 // loop_exit
    _

// kernel: trans_conv_forward.3
$region0: #{trans_conv_forward.3}
  #allocation0 [shape = 'u32[]', space=smem, size = 0x4, offset = 0x4, fixed_abs, tag = 'smem constant byte address 0x4 - core index']
  #allocation1 [shape = 'u32[72,128]{1,0:T(1,128)}', space=vmem, size = 0x9000, scoped, tag = 'internal scratch']
  %s0 = inlined_call_operand.vmem [shape: f32[128,128], index: 0, kind: input, shape index: {}]
  %s1 = inlined_call_operand.vmem [shape: f32[2,128], index: 1, kind: input, shape index: {}]
  %s2 = inlined_call_operand.vmem [shape: f32[128,128], index: 2, kind: output, shape index: {}]
  %s3 = sld [smem:[#allocation0]]
  $region41: #{trans_conv_forward.3} parent=0
    _
  %s5 = ssub.s32 1, %s3
  %s6 = scalar_select 0, %s5, %s3
  loop: start=0, step=1, limit=4
  $region2: #{trans_conv_forward.3} parent=0 // loop_pre_header
    _
  $region3: #{trans_conv_forward.3} parent=0 // loop_header
    %s8 = sphi 0, %s12
    %p9 = scmp.ge.s32.totalorder %s8, 4
    %s18 = sphi 0, %s20
    %s21 = sphi 0, %s18
    %s22 = sphi 0, %s21
    %s38 = sphi 0, %s22
    %s42 = sphi 0, %s42
    %s44 = sphi 0, %s42
    %s45 = sphi 0, %s44
    %s59 = sphi 0, %s45
    %s65 = sphi 0, %s67
    %s68 = sphi 0, %s65
    %s69 = sphi 0, %s68
    %s85 = sphi 0, %s69
  $region4: #{trans_conv_forward.3} parent=0 // loop_header_branch
    %11 = sbr.rel (%p9) target = $region8
  $region5: #{trans_conv_forward.3} parent=0 // loop_body
    %s13 = ssub.s32 %s8, 1
    %s14 = ssub.s32 %s8, 2
    %s15 = sadd.s32 %s8, 1
    %s16 = ssub.s32 %s8, %s15
    %p17 = scmp.eq.s32.totalorder %s16, 0
    %s19 = sadd.s32 %s18, 1
    %s20 = scalar_select %p17, %s18, %s19
    %p23 = pneg %p17
    %p24 = scmp.eq.s32.totalorder %s8, 1
    %p25 = por %p23, %p24
    %p26 = scmp.ne.s32.totalorder %s18, %s21
    %p27 = scmp.eq.s32.totalorder %s8, 0
    %p28 = por %p26, %p27
    %p29 = scmp.ne.s32.totalorder %s18, %s21
    %p30 = scmp.eq.s32.totalorder %s13, 1
    %p31 = por %p29, %p30
    %p32 = scmp.ne.s32.totalorder %s21, %s22
    %p33 = scmp.eq.s32.totalorder %s13, 0
    %p34 = por %p32, %p33
    %p35 = scmp.ne.s32.totalorder %s21, %s22
    %p36 = scmp.eq.s32.totalorder %s14, 1
    %p37 = por %p35, %p36
    %p39 = scmp.ne.s32.totalorder %s22, %s38
    %p40 = scmp.eq.s32.totalorder %s14, 0
    %p41 = por %p39, %p40
    %s43 = sadd.s32 %s42, 1
    %p46 = scmp.eq.s32.totalorder %s8, 1
    %p47 = scmp.ne.s32.totalorder %s42, %s44
    %p48 = scmp.eq.s32.totalorder %s8, 0
    %p49 = por %p47, %p48
    %p50 = scmp.ne.s32.totalorder %s42, %s44
    %p51 = scmp.eq.s32.totalorder %s13, 1
    %p52 = por %p50, %p51
    %p53 = scmp.ne.s32.totalorder %s44, %s45
    %p54 = scmp.eq.s32.totalorder %s13, 0
    %p55 = por %p53, %p54
    %p56 = scmp.ne.s32.totalorder %s44, %s45
    %p57 = scmp.eq.s32.totalorder %s14, 1
    %p58 = por %p56, %p57
    %p60 = scmp.ne.s32.totalorder %s45, %s59
    %p61 = scmp.eq.s32.totalorder %s14, 0
    %p62 = por %p60, %p61
    %s63 = ssub.s32 %s8, %s15
    %p64 = scmp.eq.s32.totalorder %s63, 0
    %s66 = sadd.s32 %s65, 1
    %s67 = scalar_select %p64, %s65, %s66
    %p70 = pneg %p64
    %p71 = scmp.eq.s32.totalorder %s8, 1
    %p72 = por %p70, %p71
    %p73 = scmp.ne.s32.totalorder %s65, %s68
    %p74 = scmp.eq.s32.totalorder %s8, 0
    %p75 = por %p73, %p74
    %p76 = scmp.ne.s32.totalorder %s65, %s68
    %p77 = scmp.eq.s32.totalorder %s13, 1
    %p78 = por %p76, %p77
    %p79 = scmp.ne.s32.totalorder %s68, %s69
    %p80 = scmp.eq.s32.totalorder %s13, 0
    %p81 = por %p79, %p80
    %p82 = scmp.ne.s32.totalorder %s68, %s69
    %p83 = scmp.eq.s32.totalorder %s14, 1
    %p84 = por %p82, %p83
    %p86 = scmp.ne.s32.totalorder %s69, %s85
    %p87 = scmp.eq.s32.totalorder %s14, 0
    %p88 = por %p86, %p87
    %p89 = scmp.le.s32.totalorder 1, %s8
    %p90 = scmp.lt.s32.totalorder %s8, 3
    %p91 = pnand %p89, %p90
    %p92 = pneg %p91
    // Predicated region
    $region9: #{trans_conv_forward.3} parent=5 // pred_check
      _
    $region10: #{trans_conv_forward.3} parent=5 // pred_check_branch
      %94 = sbr.rel (%p91) target = $region12
    $region11: #{trans_conv_forward.3} parent=5 // pred_region
      %s95 = ssub.s32 %s8, 1
      // Predicated region
      $region13: #{trans_conv_forward.3} parent=11 // pred_check
        %p96 = pneg %p55
      $region14: #{trans_conv_forward.3} parent=11 // pred_check_branch
        %98 = sbr.rel (%p96) target = $region16
      $region15: #{trans_conv_forward.3} parent=11 // pred_region
        _
      $region16: #{trans_conv_forward.3} parent=11 // pred_fallthru
        _
    $region12: #{trans_conv_forward.3} parent=5 // pred_fallthru
      _
    %p99 = scmp.lt.s32.totalorder %s8, 2
    // Predicated region
    $region17: #{trans_conv_forward.3} parent=5 // pred_check
      %p100 = pneg %p99
    $region18: #{trans_conv_forward.3} parent=5 // pred_check_branch
      %102 = sbr.rel (%p100) target = $region20
    $region19: #{trans_conv_forward.3} parent=5 // pred_region
      // Predicated region
      $region21: #{trans_conv_forward.3} parent=19 // pred_check
        %p103 = pneg %p28
      $region22: #{trans_conv_forward.3} parent=19 // pred_check_branch
        %105 = sbr.rel (%p103) target = $region24
      $region23: #{trans_conv_forward.3} parent=19 // pred_region
        %s106 = smul.u32 8, %s8
        %p107 = scmp.lt.s32.totalorder %s106, 15
        %s108 = scalar_select %p107, %s106, 15
        %s109 = smul.addr %s108, 8
        %s110 = scalar_lea.vmem %s0, %s109
        %s111 = smul.u32 8, %s8
      $region24: #{trans_conv_forward.3} parent=19 // pred_fallthru
        _
    $region20: #{trans_conv_forward.3} parent=5 // pred_fallthru
      _
    %p112 = scmp.le.s32.totalorder 1, %s8
    %p113 = scmp.lt.s32.totalorder %s8, 3
    %p114 = pnand %p112, %p113
    %p115 = pneg %p114
    // Predicated region
    $region25: #{trans_conv_forward.3} parent=5 // pred_check
      _
    $region26: #{trans_conv_forward.3} parent=5 // pred_check_branch
      %117 = sbr.rel (%p114) target = $region28
    $region27: #{trans_conv_forward.3} parent=5 // pred_region
      %s118 = ssub.s32 %s8, 1
      %s119 = smul.u32 8, %s13
      %p120 = scmp.lt.s32.totalorder %s119, 15
      %s121 = scalar_select %p120, %s119, 15
      %s122 = smul.addr %s121, 8
      %s123 = scalar_lea.vmem %s0, %s122
      %p124 = pneg %p34
      %p125 = pneg %p31
      %p126 = pneg %p55
      %p127 = pneg %p52
      %p128 = pneg %p81
      %p129 = pneg %p78
      %s130 = smul.u32 8, %s13
      %p131 = scmp.lt.s32.totalorder %s130, 15
      %s132 = scalar_select %p131, %s130, 15
      %s133 = smul.addr %s132, 8
      %s134 = scalar_lea.vmem %s2, %s133
      %s135 = smul.u32 8, %s13
      %p136 = scmp.lt.s32.totalorder %s135, 15
      %s137 = scalar_select %p136, %s135, 15
      %s138 = smul.addr %s137, 8
      %s139 = scalar_lea.vmem %s0, %s138
      %s140 = smul.u32 8, %s13
      %s141 = smul.u32 8, %s13
      %p142 = scmp.lt.s32.totalorder %s141, 15
      %s143 = scalar_select %p142, %s141, 15
      %s144 = smul.addr %s143, 8
      %s145 = scalar_lea.vmem %s2, %s144
      %s146 = smul.u32 8, %s13
      %v147 = vld [vmem:[%s139] sm:$0xff]
      %v148 = vld [vmem:[%s139 + $0x8] sm:$0xff]
      %v149 = vld [vmem:[%s139 + $0x10] sm:$0xff]
      %v150 = vld [vmem:[%s139 + $0x18] sm:$0xff]
      %v151 = vld [vmem:[%s139 + $0x20] sm:$0xff]
      %v152 = vld [vmem:[%s139 + $0x28] sm:$0xff]
      %v153 = vld [vmem:[%s139 + $0x30] sm:$0xff]
      %v154 = vld [vmem:[%s139 + $0x38] sm:$0xff]
      %v155 = vld [vmem:[%s1] sm:$0x1]
      %v156 = vld [vmem:[%s1 + $0x1] sm:$0x1]
      %v157 = vperm.slane %v155, 0
      %v158 = vmul.f32 %v147, %v157
      %v159 = vmul.f32 %v148, %v157
      %v160 = vmul.f32 %v149, %v157
      %v161 = vmul.f32 %v150, %v157
      %v162 = vmul.f32 %v151, %v157
      %v163 = vmul.f32 %v152, %v157
      %v164 = vmul.f32 %v153, %v157
      %v165 = vmul.f32 %v154, %v157
      %v166 = vperm.slane %v156, 0
      %v167 = vadd.f32 %v158, %v166
      %v168 = vadd.f32 %v159, %v166
      %v169 = vadd.f32 %v160, %v166
      %v170 = vadd.f32 %v161, %v166
      %v171 = vadd.f32 %v162, %v166
      %v172 = vadd.f32 %v163, %v166
      %v173 = vadd.f32 %v164, %v166
      %v174 = vadd.f32 %v165, %v166
      %175 = vst [vmem:[%s145] sm:$0xff] %v167
      %176 = vst [vmem:[%s145 + $0x8] sm:$0xff] %v168
      %177 = vst [vmem:[%s145 + $0x10] sm:$0xff] %v169
      %178 = vst [vmem:[%s145 + $0x18] sm:$0xff] %v170
      %179 = vst [vmem:[%s145 + $0x20] sm:$0xff] %v171
      %180 = vst [vmem:[%s145 + $0x28] sm:$0xff] %v172
      %181 = vst [vmem:[%s145 + $0x30] sm:$0xff] %v173
      %182 = vst [vmem:[%s145 + $0x38] sm:$0xff] %v174
      %s183 = smul.u32 8, %s13
      %p184 = scmp.lt.s32.totalorder %s183, 15
      %s185 = scalar_select %p184, %s183, 15
      %s186 = smul.addr %s185, 8
      %s187 = scalar_lea.vmem %s2, %s186
      // Predicated region
      $region29: #{trans_conv_forward.3} parent=27 // pred_check
        %p188 = pneg %p78
      $region30: #{trans_conv_forward.3} parent=27 // pred_check_branch
        %190 = sbr.rel (%p188) target = $region32
      $region31: #{trans_conv_forward.3} parent=27 // pred_region
        %s191 = smul.u32 8, %s13
      $region32: #{trans_conv_forward.3} parent=27 // pred_fallthru
        _
    $region28: #{trans_conv_forward.3} parent=5 // pred_fallthru
      _
    %p192 = scmp.le.s32.totalorder 2, %s8
    // Predicated region
    $region33: #{trans_conv_forward.3} parent=5 // pred_check
      %p193 = pneg %p192
    $region34: #{trans_conv_forward.3} parent=5 // pred_check_branch
      %195 = sbr.rel (%p193) target = $region36
    $region35: #{trans_conv_forward.3} parent=5 // pred_region
      %s196 = ssub.s32 %s8, 2
      // Predicated region
      $region37: #{trans_conv_forward.3} parent=35 // pred_check
        %p197 = pneg %p84
      $region38: #{trans_conv_forward.3} parent=35 // pred_check_branch
        %199 = sbr.rel (%p197) target = $region40
      $region39: #{trans_conv_forward.3} parent=35 // pred_region
        %s200 = smul.u32 8, %s14
        %p201 = scmp.lt.s32.totalorder %s200, 15
        %s202 = scalar_select %p201, %s200, 15
        %s203 = smul.addr %s202, 8
        %s204 = scalar_lea.vmem %s2, %s203
      $region40: #{trans_conv_forward.3} parent=35 // pred_fallthru
        _
    $region36: #{trans_conv_forward.3} parent=5 // pred_fallthru
      _
  $region6: #{trans_conv_forward.3} parent=0 // loop_footer
    %s12 = sadd.s32 1, %s8
  $region7: #{trans_conv_forward.3} parent=0 // loop_footer_branch
    %7 = sbr.rel target = $region3
  $region8: #{trans_conv_forward.3} parent=0 // loop_exit
    _

</llo_original>
